<compile_context>
chip_gen: v7x
topology: tpu7x:2x2x1
jax: 0.10.0
libtpu: 0.0.40
codegen_flags: <defaults>
</compile_context>

<pallas_src>
import jax
import jax.numpy as jnp
from jax.experimental import pallas as pl
from jax.experimental.pallas import tpu as pltpu


_LANE = 128
_NSPLIT = 2                       # HW splits for the single-image multi-core path
_BLOCK_BUDGET = 8 * 1024 * 1024   # target bytes of (padded) input per pipeline block
_VMEM_CAP = 48 * 1024 * 1024      # scoped-VMEM request ceiling (safe on v7x's 64 MiB)


def _round_up(v, m):
    return -(-v // m) * m


def _gate_from_pooled(sum_col, max_col, w1, w2, inv_hw):
    """sum_col/max_col: (C, 1) f32; w1: (Cr, C) f32; w2: (Cout, Cr) f32.
    Returns sigmoid(fc2(relu(fc1(avg))) + fc2(relu(fc1(max)))) as (Cout, 1) f32."""
    c = sum_col.shape[0]
    avg_col = sum_col * inv_hw
    # Pack avg/max as the two columns of a single (C, 2) matrix -> one fc1/fc2.
    colsel = jax.lax.broadcasted_iota(jnp.int32, (c, 2), 1)
    pooled = jnp.where(colsel == 0, avg_col, max_col)                     # (C, 2)
    h = jnp.maximum(jnp.dot(w1, pooled, preferred_element_type=jnp.float32), 0.0)
    o = jnp.dot(w2, h, preferred_element_type=jnp.float32)                # (Cout, 2)
    return jax.nn.sigmoid(jnp.sum(o, axis=1, keepdims=True))              # (Cout, 1)


def cab_forward(x_nchw, w1, w2, *, split_hw=None, block_budget_bytes=None):
    """CAB forward.  x_nchw: (N, C, H, W); w1: (Cr, C) fc1; w2: (Cout, Cr) fc2.
    Returns (N, Cout, 1, 1), matching the PyTorch CAB.forward output.
    split_hw=None auto-enables the two-core HW split for N == 1;
    block_budget_bytes overrides the per-block input budget (used by tests)."""
    N, C, H, W = x_nchw.shape
    Cr = w1.shape[0]
    Cout = w2.shape[0]
    HW = H * W
    inv_hw = 1.0 / float(HW)
    itemsize = jnp.dtype(x_nchw.dtype).itemsize
    budget = _BLOCK_BUDGET if block_budget_bytes is None else int(block_budget_bytes)

    # NCHW -> (N, C, HW): metadata-only reshape; HW is contiguous (lane axis).
    x = x_nchw.reshape(N, C, HW)

    # Sublane-padded VMEM footprint of one (C, lanes) slab.
    # TODO(synk): for very small C (< 8 rows f32 / < 16 bf16), pack spatial
    # sub-rows into the padded sublanes ((N, C*G, HW//G)) and fold per channel
    # in the finalize to remove the padding entirely.
    rows_quantum = 8 * max(1, 4 // itemsize)            # 8 (f32) / 16 (bf16) / 32 (i8)
    c_padded = _round_up(C, rows_quantum)
    row_bytes = c_padded * itemsize

    # Largest lane tile that keeps one padded block under the budget; prefer a
    # single block (num_k == 1) covering all of HW.
    budget_lanes = max(_LANE, (budget // row_bytes) // _LANE * _LANE)
    if budget_lanes >= HW:
        THW, num_k, needs_mask = HW, 1, False
    else:
        THW = budget_lanes
        num_k = int(pl.cdiv(HW, THW))
        needs_mask = (HW % THW) != 0

    def block_vmem(lanes):
        return c_padded * _round_up(lanes, _LANE) * itemsize

    use_split = (N == 1 and HW > _LANE) if split_hw is None else bool(split_hw)

    # ------------------------------------------------------------------ #
    # Default path: one fused kernel, grid (N, num_k), batch parallel.    #
    # ------------------------------------------------------------------ #
    if not use_split:
        def kernel(x_ref, w1_ref, w2_ref, out_ref, sum_acc, max_acc):
            k = pl.program_id(1)

            @pl.when(k == 0)
            def _init():
                sum_acc[...] = jnp.zeros_like(sum_acc)
                max_acc[...] = jnp.full_like(max_acc, -jnp.inf)

            xv = x_ref[0]                                    # (C, THW), input dtype

            def _accum(xs_f32, xm):
                sum_acc[...] += jnp.sum(xs_f32, axis=1, keepdims=True)
                max_acc[...] = jnp.maximum(
                    max_acc[...],
                    jnp.max(xm, axis=1, keepdims=True).astype(jnp.float32))

            if needs_mask:
                # Only the last tile is partial: full tiles skip the mask work.
                @pl.when(k < num_k - 1)
                def _full():
                    _accum(xv.astype(jnp.float32), xv)

                @pl.when(k == num_k - 1)
                def _tail():
                    lane = jax.lax.broadcasted_iota(jnp.int32, (C, THW), 1)
                    valid = (k * THW + lane) < HW
                    _accum(jnp.where(valid, xv.astype(jnp.float32), 0.0),
                           jnp.where(valid, xv, jnp.asarray(-jnp.inf, xv.dtype)))
            else:
                _accum(xv.astype(jnp.float32), xv)

            @pl.when(k == num_k - 1)
            def _finalize():
                gate = _gate_from_pooled(sum_acc[...], max_acc[...],
                                         w1_ref[...].astype(jnp.float32),
                                         w2_ref[...].astype(jnp.float32), inv_hw)
                out_ref[0] = gate.astype(out_ref.dtype)

        vmem_limit = int(min(_VMEM_CAP, 2 * block_vmem(THW) + 8 * 1024 * 1024))
        out = pl.pallas_call(
            kernel,
            out_shape=jax.ShapeDtypeStruct((N, Cout, 1), x_nchw.dtype),
            grid_spec=pltpu.PrefetchScalarGridSpec(
                num_scalar_prefetch=0,
                grid=(N, num_k),
                in_specs=[
                    pl.BlockSpec((1, C, THW), lambda n, k: (n, 0, k)),
                    pl.BlockSpec((Cr, C), lambda n, k: (0, 0)),
                    pl.BlockSpec((Cout, Cr), lambda n, k: (0, 0)),
                ],
                out_specs=pl.BlockSpec((1, Cout, 1), lambda n, k: (n, 0, 0)),
                scratch_shapes=[
                    pltpu.VMEM((C, 1), jnp.float32),   # running sum
                    pltpu.VMEM((C, 1), jnp.float32),   # running max
                ],
            ),
            compiler_params=pltpu.CompilerParams(
                dimension_semantics=("parallel", "arbitrary"),
                vmem_limit_bytes=vmem_limit,
            ),
            cost_estimate=pl.CostEstimate(
                flops=2 * N * C * HW + 2 * N * 2 * (C * Cr + Cr * Cout),
                transcendentals=N * Cout,
                bytes_accessed=(N * C * HW * itemsize + N * Cout * itemsize
                                + (Cr * C + Cout * Cr) * itemsize),
            ),
        )(x, w1, w2)
        return out.reshape(N, Cout, 1, 1)

    # ------------------------------------------------------------------ #
    # Single-image path: split HW across a leading parallel axis so both  #
    # TensorCores stream HBM (v7x); merge partials in a tiny 2nd kernel.  #
    # ------------------------------------------------------------------ #
    half_lanes = -(-HW // _NSPLIT)
    thw_s = min(THW, max(_LANE, _round_up(half_lanes, _LANE)))
    if thw_s >= HW:
        thw_s = HW
    num_k_tot = int(pl.cdiv(HW, thw_s))
    kps = int(pl.cdiv(num_k_tot, _NSPLIT))        # hw-blocks per split

    def pool_kernel(x_ref, psum_ref, pmax_ref):
        s = pl.program_id(0)
        k = pl.program_id(2)

        @pl.when(k == 0)
        def _init():
            psum_ref[...] = jnp.zeros_like(psum_ref)
            pmax_ref[...] = jnp.full_like(pmax_ref, -jnp.inf)

        xv = x_ref[0]                                   # (C, thw_s)
        start = (s * kps + k) * thw_s                   # un-clamped global lane offset

        def _accum(xs_f32, xm):
            psum_ref[0, 0] += jnp.sum(xs_f32, axis=1, keepdims=True)
            pmax_ref[0, 0] = jnp.maximum(
                pmax_ref[0, 0],
                jnp.max(xm, axis=1, keepdims=True).astype(jnp.float32))

        @pl.when(start + thw_s <= HW)
        def _full():
            _accum(xv.astype(jnp.float32), xv)

        @pl.when(start + thw_s > HW)
        def _tail():
            # Covers the partial last tile and (for odd block counts) the
            # duplicated clamped tile of the other split (fully masked out).
            lane = jax.lax.broadcasted_iota(jnp.int32, (C, thw_s), 1)
            valid = (start + lane) < HW
            _accum(jnp.where(valid, xv.astype(jnp.float32), 0.0),
                   jnp.where(valid, xv, jnp.asarray(-jnp.inf, xv.dtype)))

    partial_shape = jax.ShapeDtypeStruct((_NSPLIT, N, C, 1), jnp.float32)
    vmem_limit = int(min(_VMEM_CAP, 2 * block_vmem(thw_s) + 8 * 1024 * 1024))
    psum, pmax = pl.pallas_call(
        pool_kernel,
        out_shape=(partial_shape, partial_shape),
        grid_spec=pltpu.PrefetchScalarGridSpec(
            num_scalar_prefetch=0,
            grid=(_NSPLIT, N, kps),
            in_specs=[
                pl.BlockSpec(
                    (1, C, thw_s),
                    lambda s, n, k: (n, 0, jnp.minimum(s * kps + k, num_k_tot - 1))),
            ],
            out_specs=(
                pl.BlockSpec((1, 1, C, 1), lambda s, n, k: (s, n, 0, 0)),
                pl.BlockSpec((1, 1, C, 1), lambda s, n, k: (s, n, 0, 0)),
            ),
        ),
        compiler_params=pltpu.CompilerParams(
            dimension_semantics=("parallel", "parallel", "arbitrary"),
            vmem_limit_bytes=vmem_limit,
        ),
    )(x)

    def merge_kernel(psum_ref, pmax_ref, w1_ref, w2_ref, out_ref):
        sum_c = psum_ref[0, 0]
        max_c = pmax_ref[0, 0]
        for si in range(1, _NSPLIT):
            sum_c = sum_c + psum_ref[si, 0]
            max_c = jnp.maximum(max_c, pmax_ref[si, 0])
        gate = _gate_from_pooled(sum_c, max_c,
                                 w1_ref[...].astype(jnp.float32),
                                 w2_ref[...].astype(jnp.float32), inv_hw)
        out_ref[0] = gate.astype(out_ref.dtype)

    out = pl.pallas_call(
        merge_kernel,
        out_shape=jax.ShapeDtypeStruct((N, Cout, 1), x_nchw.dtype),
        grid_spec=pltpu.PrefetchScalarGridSpec(
            num_scalar_prefetch=0,
            grid=(N,),
            in_specs=[
                pl.BlockSpec((_NSPLIT, 1, C, 1), lambda n: (0, n, 0, 0)),
                pl.BlockSpec((_NSPLIT, 1, C, 1), lambda n: (0, n, 0, 0)),
                pl.BlockSpec((Cr, C), lambda n: (0, 0)),
                pl.BlockSpec((Cout, Cr), lambda n: (0, 0)),
            ],
            out_specs=pl.BlockSpec((1, Cout, 1), lambda n: (n, 0, 0)),
        ),
        compiler_params=pltpu.CompilerParams(
            dimension_semantics=("parallel",),
        ),
    )(psum, pmax, w1, w2)
    return out.reshape(N, Cout, 1, 1)


def make_cab_params(key, in_channels, out_channels=None, ratio=16,
                    dtype=jnp.float32):
    """Deterministic synthetic weights matching the PyTorch module's 'normal'
    init (std=0.02, no bias), in PyTorch layout: fc1 (Cr, C), fc2 (Cout, Cr)."""
    if in_channels < ratio:
        ratio = in_channels
    reduced = in_channels // ratio
    if out_channels is None:
        out_channels = in_channels
    k1, k2 = jax.random.split(key)
    w1 = (0.02 * jax.random.normal(k1, (reduced, in_channels))).astype(dtype)
    w2 = (0.02 * jax.random.normal(k2, (out_channels, reduced))).astype(dtype)
    return w1, w2


def cab_reference(x, w1, w2):
    """Pure-JAX reference of the PyTorch CAB.forward."""
    avg = jnp.mean(x, axis=(2, 3))                       # (N, C)
    mx = jnp.max(x, axis=(2, 3))                         # (N, C)
    a = jnp.maximum(avg @ w1.T, 0.0) @ w2.T
    m = jnp.maximum(mx @ w1.T, 0.0) @ w2.T
    return jax.nn.sigmoid(a + m).reshape(x.shape[0], -1, 1, 1)


if __name__ == "__main__":
    key = jax.random.PRNGKey(0)
    kx, kp, kx2 = jax.random.split(key, 3)

    N, C, H, W = 2, 4, 16, 16
    w1, w2 = make_cab_params(kp, in_channels=C, ratio=16)

    # Test 1: fused single-kernel path (batch-parallel, single HW block).
    x = jax.random.normal(kx, (N, C, H, W), dtype=jnp.float32)
    out = cab_forward(x, w1, w2)
    jax.block_until_ready(out)
    ref = cab_reference(x, w1, w2)
    assert out.shape == ref.shape
    assert jnp.allclose(out, ref, atol=1e-5), "mismatch vs reference (fused path)"

    # Test 2: single-image path -> HW split across the two-TensorCore parallel
    # axis + merge kernel; HW=225 also exercises the masked tail tile.
    x1 = jax.random.normal(kx2, (1, C, 15, 15), dtype=jnp.float32)
    out1 = cab_forward(x1, w1, w2)
    jax.block_until_ready(out1)
    ref1 = cab_reference(x1, w1, w2)
    assert out1.shape == ref1.shape
    assert jnp.allclose(out1, ref1, atol=1e-5), "mismatch vs reference (split path)"

    # Test 3: force a multi-block HW reduction + masked tail in the fused path
    # by shrinking the block budget (exercises the k-accumulator logic).
    x3 = jax.random.normal(kx, (2, C, 15, 15), dtype=jnp.float32)
    out3 = cab_forward(x3, w1, w2, block_budget_bytes=1)
    jax.block_until_ready(out3)
    ref3 = cab_reference(x3, w1, w2)
    assert jnp.allclose(out3, ref3, atol=1e-5), "mismatch vs reference (tiled path)"

    print("KERNEL_OK")
</pallas_src>

<mosaic_0001>
module attributes {stable_mosaic.version = 11 : i64} {
  func.func @kernel(%arg0: i32, %arg1: i32, %arg2: memref<1x4x256xf32, #tpu.memory_space<vmem>>, %arg3: memref<1x4xf32, #tpu.memory_space<vmem>>, %arg4: memref<4x1xf32, #tpu.memory_space<vmem>>, %arg5: memref<1x4x1xf32, #tpu.memory_space<vmem>>, %arg6: memref<4x1xf32, #tpu.memory_space<vmem>>, %arg7: memref<4x1xf32, #tpu.memory_space<vmem>>) attributes {dimension_semantics = [#tpu.dimension_semantics<parallel>, #tpu.dimension_semantics<arbitrary>], iteration_bounds = array<i64: 2, 1>, scalar_prefetch = 0 : i64, scratch_operands = 2 : i64, tpu.core_type = #tpu.core_type<tc>, window_params = [{transform_indices = @transform_0, window_bounds = array<i64: 1, 4, 256>}, {pipeline_mode = #tpu.pipeline_mode<synchronous>, transform_indices = @transform_1, window_bounds = array<i64: 1, 4>}, {pipeline_mode = #tpu.pipeline_mode<synchronous>, transform_indices = @transform_2, window_bounds = array<i64: 4, 1>}, {transform_indices = @transform_3, window_bounds = array<i64: 1, 4, 1>}]} {
    %c0_i32 = arith.constant 0 : i32
    %0 = arith.cmpi eq, %arg1, %c0_i32 : i32
    %1 = arith.extui %0 : i1 to i32
    %c0_i32_0 = arith.constant 0 : i32
    %2 = arith.cmpi ne, %1, %c0_i32_0 : i32
    scf.if %2 {
      %cst_14 = arith.constant 0.000000e+00 : f32
      %18 = vector.broadcast %cst_14 : f32 to vector<4x1xf32>
      %c0_15 = arith.constant 0 : index
      %c0_16 = arith.constant 0 : index
      %19 = vector.load %arg6[%c0_15, %c0_16] : memref<4x1xf32, #tpu.memory_space<vmem>>, vector<4x1xf32>
      tpu.vector_store %arg6[%c0_15, %c0_16], %18 {strides = array<i32>} : memref<4x1xf32, #tpu.memory_space<vmem>>, vector<4x1xf32>,
      %cst_17 = arith.constant 0xFF800000 : f32
      %20 = vector.broadcast %cst_17 : f32 to vector<4x1xf32>
      %c0_18 = arith.constant 0 : index
      %c0_19 = arith.constant 0 : index
      %21 = vector.load %arg7[%c0_18, %c0_19] : memref<4x1xf32, #tpu.memory_space<vmem>>, vector<4x1xf32>
      tpu.vector_store %arg7[%c0_18, %c0_19], %20 {strides = array<i32>} : memref<4x1xf32, #tpu.memory_space<vmem>>, vector<4x1xf32>,
    } else {
    }
    %c0 = arith.constant 0 : index
    %c0_1 = arith.constant 0 : index
    %c0_2 = arith.constant 0 : index
    %3 = vector.load %arg2[%c0, %c0_1, %c0_2] : memref<1x4x256xf32, #tpu.memory_space<vmem>>, vector<1x4x256xf32>
    %4 = vector.shape_cast %3 : vector<1x4x256xf32> to vector<4x256xf32>
    %c0_3 = arith.constant 0 : index
    %c0_4 = arith.constant 0 : index
    %5 = vector.load %arg6[%c0_3, %c0_4] : memref<4x1xf32, #tpu.memory_space<vmem>>, vector<4x1xf32>
    %cst = arith.constant dense<0.000000e+00> : vector<4xf32>
    %6 = vector.multi_reduction <add>, %4, %cst [1] : vector<4x256xf32> to vector<4xf32>
    %7 = vector.shape_cast %6 : vector<4xf32> to vector<4x1xf32>
    %8 = arith.addf %5, %7 : vector<4x1xf32>
    %c0_5 = arith.constant 0 : index
    %c0_6 = arith.constant 0 : index
    %9 = vector.load %arg6[%c0_5, %c0_6] : memref<4x1xf32, #tpu.memory_space<vmem>>, vector<4x1xf32>
    tpu.vector_store %arg6[%c0_5, %c0_6], %8 {strides = array<i32>} : memref<4x1xf32, #tpu.memory_space<vmem>>, vector<4x1xf32>,
    %c0_7 = arith.constant 0 : index
    %c0_8 = arith.constant 0 : index
    %10 = vector.load %arg7[%c0_7, %c0_8] : memref<4x1xf32, #tpu.memory_space<vmem>>, vector<4x1xf32>
    %cst_9 = arith.constant dense<0xFF800000> : vector<4xf32>
    %11 = vector.multi_reduction <maximumf>, %4, %cst_9 [1] : vector<4x256xf32> to vector<4xf32>
    %12 = vector.shape_cast %11 : vector<4xf32> to vector<4x1xf32>
    %13 = arith.maximumf %10, %12 : vector<4x1xf32>
    %c0_10 = arith.constant 0 : index
    %c0_11 = arith.constant 0 : index
    %14 = vector.load %arg7[%c0_10, %c0_11] : memref<4x1xf32, #tpu.memory_space<vmem>>, vector<4x1xf32>
    tpu.vector_store %arg7[%c0_10, %c0_11], %13 {strides = array<i32>} : memref<4x1xf32, #tpu.memory_space<vmem>>, vector<4x1xf32>,
    %c0_i32_12 = arith.constant 0 : i32
    %15 = arith.cmpi eq, %arg1, %c0_i32_12 : i32
    %16 = arith.extui %15 : i1 to i32
    %c0_i32_13 = arith.constant 0 : i32
    %17 = arith.cmpi ne, %16, %c0_i32_13 : i32
    scf.if %17 {
      %c0_14 = arith.constant 0 : index
      %c0_15 = arith.constant 0 : index
      %18 = vector.load %arg6[%c0_14, %c0_15] : memref<4x1xf32, #tpu.memory_space<vmem>>, vector<4x1xf32>
      %c0_16 = arith.constant 0 : index
      %c0_17 = arith.constant 0 : index
      %19 = vector.load %arg7[%c0_16, %c0_17] : memref<4x1xf32, #tpu.memory_space<vmem>>, vector<4x1xf32>
      %c0_18 = arith.constant 0 : index
      %c0_19 = arith.constant 0 : index
      %20 = vector.load %arg3[%c0_18, %c0_19] : memref<1x4xf32, #tpu.memory_space<vmem>>, vector<1x4xf32>
      %c0_20 = arith.constant 0 : index
      %c0_21 = arith.constant 0 : index
      %21 = vector.load %arg4[%c0_20, %c0_21] : memref<4x1xf32, #tpu.memory_space<vmem>>, vector<4x1xf32>
      %cst_22 = arith.constant 3.906250e-03 : f32
      %22 = vector.broadcast %cst_22 : f32 to vector<4x1xf32>
      %23 = arith.mulf %18, %22 : vector<4x1xf32>
      %24 = tpu.iota {dimensions = array<i32: 1>} : vector<4x2xi32>
      %c0_i32_23 = arith.constant 0 : i32
      %25 = vector.broadcast %c0_i32_23 : i32 to vector<4x2xi32>
      %26 = arith.cmpi eq, %24, %25 : vector<4x2xi32>
      %27 = vector.shape_cast %23 : vector<4x1xf32> to vector<4x1xf32>
      %28 = vector.broadcast %27 : vector<4x1xf32> to vector<4x2xf32>
      %29 = vector.shape_cast %19 : vector<4x1xf32> to vector<4x1xf32>
      %30 = vector.broadcast %29 : vector<4x1xf32> to vector<4x2xf32>
      %31 = arith.select %26, %28, %30 : vector<4x2xi1>, vector<4x2xf32>
      %cst_24 = arith.constant dense<0.000000e+00> : vector<1x2xf32>
      %32 = tpu.matmul %20, %31, %cst_24 {dimension_numbers = #tpu.dot_dimension_numbers<[1], [0], [0], [1], [0, 0, 1, 1], [], []>} : vector<1x4xf32>, vector<4x2xf32>, vector<1x2xf32> -> vector<1x2xf32>
      %cst_25 = arith.constant 0.000000e+00 : f32
      %33 = vector.broadcast %cst_25 : f32 to vector<1x2xf32>
      %34 = arith.maximumf %32, %33 : vector<1x2xf32>
      %cst_26 = arith.constant dense<0.000000e+00> : vector<4x2xf32>
      %35 = tpu.matmul %21, %34, %cst_26 {dimension_numbers = #tpu.dot_dimension_numbers<[1], [0], [0], [1], [0, 0, 1, 1], [], []>} : vector<4x1xf32>, vector<1x2xf32>, vector<4x2xf32> -> vector<4x2xf32>
      %cst_27 = arith.constant dense<0.000000e+00> : vector<4xf32>
      %36 = vector.multi_reduction <add>, %35, %cst_27 [1] : vector<4x2xf32> to vector<4xf32>
      %37 = vector.shape_cast %36 : vector<4xf32> to vector<4x1xf32>
      %38 = arith.negf %37 : vector<4x1xf32>
      %39 = math.exp %38 : vector<4x1xf32>
      %cst_28 = arith.constant 1.000000e+00 : f32
      %40 = vector.broadcast %cst_28 : f32 to vector<4x1xf32>
      %41 = arith.addf %40, %39 : vector<4x1xf32>
      %42 = arith.divf %40, %41 : vector<4x1xf32>
      %c0_29 = arith.constant 0 : index
      %c0_30 = arith.constant 0 : index
      %c0_31 = arith.constant 0 : index
      %43 = vector.load %arg5[%c0_29, %c0_30, %c0_31] : memref<1x4x1xf32, #tpu.memory_space<vmem>>, vector<1x4x1xf32>
      %44 = vector.shape_cast %43 : vector<1x4x1xf32> to vector<4x1xf32>
      %45 = vector.shape_cast %42 : vector<4x1xf32> to vector<1x4x1xf32>
      tpu.vector_store %arg5[%c0_29, %c0_30, %c0_31], %45 {strides = array<i32>} : memref<1x4x1xf32, #tpu.memory_space<vmem>>, vector<1x4x1xf32>,
    } else {
    }
    return
  }
  func.func @transform_0(%arg0: i32, %arg1: i32) -> (i32, i32, i32) {
    %c0_i32 = arith.constant 0 : i32
    %c0_i32_0 = arith.constant 0 : i32
    return %arg0, %c0_i32, %arg1 : i32, i32, i32
  }
  func.func @transform_1(%arg0: i32, %arg1: i32) -> (i32, i32) {
    %c0_i32 = arith.constant 0 : i32
    %c0_i32_0 = arith.constant 0 : i32
    %c0_i32_1 = arith.constant 0 : i32
    return %c0_i32, %c0_i32_0 : i32, i32
  }
  func.func @transform_2(%arg0: i32, %arg1: i32) -> (i32, i32) {
    %c0_i32 = arith.constant 0 : i32
    %c0_i32_0 = arith.constant 0 : i32
    %c0_i32_1 = arith.constant 0 : i32
    return %c0_i32, %c0_i32_0 : i32, i32
  }
  func.func @transform_3(%arg0: i32, %arg1: i32) -> (i32, i32, i32) {
    %c0_i32 = arith.constant 0 : i32
    %c0_i32_0 = arith.constant 0 : i32
    %c0_i32_1 = arith.constant 0 : i32
    return %arg0, %c0_i32, %c0_i32_0 : i32, i32, i32
  }
}

</mosaic_0001>

<llo_original>
// kernel: tpu_custom_call.1
$region0: #{tpu_custom_call.1}
  #allocation0 [shape = 'u32[]', space=smem, size = 0x4, offset = 0x4, fixed_abs, tag = 'smem constant byte address 0x4 - core index']
  #allocation1 [shape = 'u32[144,128]{1,0:T(1,128)}', space=vmem, size = 0x12000, scoped, tag = 'internal scratch']
  #allocation2 [shape = 'f32[4,1]{1,0:T(4,128)}', space=vmem, size = 0x800, scoped, tag = 'scratch operand']
  #allocation3 [shape = 'f32[4,1]{1,0:T(4,128)}', space=vmem, size = 0x800, scoped, tag = 'scratch operand']
  %s0 = inlined_call_operand.hbm [shape: f32[2,4,256], index: 0, kind: input, shape index: {}]
  %s1 = inlined_call_operand.vmem [shape: f32[1,4], index: 1, kind: input, shape index: {}]
  %s2 = inlined_call_operand.vmem [shape: f32[4,1], index: 2, kind: input, shape index: {}]
  %s3 = inlined_call_operand.vmem [shape: f32[2,4,1], index: 3, kind: output, shape index: {}]
  %s4 = sld [smem:[#allocation0]]
  $region57: #{tpu_custom_call.1} parent=0
    _
  %s6 = ssub.s32 1, %s4
  %s7 = scalar_select 0, %s6, %s4
  $region1: #{tpu_custom_call.1} parent=0
    #allocation4 [shape = 'u8[8192]{0}', space=vmem, size = 0x2000, scoped, tag = 'input window, operand 0']
    #allocation5 [shape = 's32[2]{0}', space=sflag, size = 0x8, scoped, tag = 'scoped memory for tpu_custom_call.1']
    %8 = vsyncpa [#allocation5], 0
    %s9 = scalar_lea.sflag [#allocation5], 1
    %10 = vsyncpa %s9, 0
    loop: start=0, step=1, limit=4
    $region2: #{tpu_custom_call.1} parent=1 // loop_pre_header
      _
    $region3: #{tpu_custom_call.1} parent=1 // loop_header
      %s12 = sphi 0, %s16
      %p13 = scmp.ge.s32.totalorder %s12, 4
      %s19 = sphi 0, %s31
      %s20 = sphi 0, %s27
      %s21 = sphi 0, %s19
      %s22 = sphi 0, %s20
      %s23 = sphi 0, %s21
      %s24 = sphi 0, %s22
      %s36 = sphi 0, %s38
      %s39 = sphi 0, %s36
      %s40 = sphi 0, %s39
      %s56 = sphi 0, %s40
      %s60 = sphi 0, %s60
      %s62 = sphi 0, %s60
      %s63 = sphi 0, %s62
      %s77 = sphi 0, %s63
      %s81 = sphi 0, %s81
      %s83 = sphi 0, %s81
      %s84 = sphi 0, %s83
      %s98 = sphi 0, %s84
      %s104 = sphi 0, %s106
      %s107 = sphi 0, %s104
      %s108 = sphi 0, %s107
      %s124 = sphi 0, %s108
    $region4: #{tpu_custom_call.1} parent=1 // loop_header_branch
      %15 = sbr.rel (%p13) target = $region8
    $region5: #{tpu_custom_call.1} parent=1 // loop_body
      %s17 = ssub.s32 %s12, 1
      %s18 = ssub.s32 %s12, 2
      %s25 = sadd.s32 1, %s20
      %p26 = scmp.ge.s32.totalorder %s25, 1
      %s27 = scalar_select %p26, 0, %s25
      %s28 = sadd.s32 1, %s19
      %s29 = scalar_select %p26, %s28, %s19
      %p30 = scmp.ge.s32.totalorder %s29, 2
      %s31 = scalar_select %p30, 0, %s29
      %s32 = ssub.s32 %s19, %s31
      %s33 = ssub.s32 %s20, %s27
      %s34 = sor.u32 %s32, %s33
      %p35 = scmp.eq.s32.totalorder %s34, 0
      %s37 = sadd.s32 %s36, 1
      %s38 = scalar_select %p35, %s36, %s37
      %p41 = pneg %p35
      %p42 = scmp.eq.s32.totalorder %s12, 1
      %p43 = por %p41, %p42
      %p44 = scmp.ne.s32.totalorder %s36, %s39
      %p45 = scmp.eq.s32.totalorder %s12, 0
      %p46 = por %p44, %p45
      %p47 = scmp.ne.s32.totalorder %s36, %s39
      %p48 = scmp.eq.s32.totalorder %s17, 1
      %p49 = por %p47, %p48
      %p50 = scmp.ne.s32.totalorder %s39, %s40
      %p51 = scmp.eq.s32.totalorder %s17, 0
      %p52 = por %p50, %p51
      %p53 = scmp.ne.s32.totalorder %s39, %s40
      %p54 = scmp.eq.s32.totalorder %s18, 1
      %p55 = por %p53, %p54
      %p57 = scmp.ne.s32.totalorder %s40, %s56
      %p58 = scmp.eq.s32.totalorder %s18, 0
      %p59 = por %p57, %p58
      %s61 = sadd.s32 %s60, 1
      %p64 = scmp.eq.s32.totalorder %s12, 1
      %p65 = scmp.ne.s32.totalorder %s60, %s62
      %p66 = scmp.eq.s32.totalorder %s12, 0
      %p67 = por %p65, %p66
      %p68 = scmp.ne.s32.totalorder %s60, %s62
      %p69 = scmp.eq.s32.totalorder %s17, 1
      %p70 = por %p68, %p69
      %p71 = scmp.ne.s32.totalorder %s62, %s63
      %p72 = scmp.eq.s32.totalorder %s17, 0
      %p73 = por %p71, %p72
      %p74 = scmp.ne.s32.totalorder %s62, %s63
      %p75 = scmp.eq.s32.totalorder %s18, 1
      %p76 = por %p74, %p75
      %p78 = scmp.ne.s32.totalorder %s63, %s77
      %p79 = scmp.eq.s32.totalorder %s18, 0
      %p80 = por %p78, %p79
      %s82 = sadd.s32 %s81, 1
      %p85 = scmp.eq.s32.totalorder %s12, 1
      %p86 = scmp.ne.s32.totalorder %s81, %s83
      %p87 = scmp.eq.s32.totalorder %s12, 0
      %p88 = por %p86, %p87
      %p89 = scmp.ne.s32.totalorder %s81, %s83
      %p90 = scmp.eq.s32.totalorder %s17, 1
      %p91 = por %p89, %p90
      %p92 = scmp.ne.s32.totalorder %s83, %s84
      %p93 = scmp.eq.s32.totalorder %s17, 0
      %p94 = por %p92, %p93
      %p95 = scmp.ne.s32.totalorder %s83, %s84
      %p96 = scmp.eq.s32.totalorder %s18, 1
      %p97 = por %p95, %p96
      %p99 = scmp.ne.s32.totalorder %s84, %s98
      %p100 = scmp.eq.s32.totalorder %s18, 0
      %p101 = por %p99, %p100
      %s102 = ssub.s32 %s19, %s31
      %p103 = scmp.eq.s32.totalorder %s102, 0
      %s105 = sadd.s32 %s104, 1
      %s106 = scalar_select %p103, %s104, %s105
      %p109 = pneg %p103
      %p110 = scmp.eq.s32.totalorder %s12, 1
      %p111 = por %p109, %p110
      %p112 = scmp.ne.s32.totalorder %s104, %s107
      %p113 = scmp.eq.s32.totalorder %s12, 0
      %p114 = por %p112, %p113
      %p115 = scmp.ne.s32.totalorder %s104, %s107
      %p116 = scmp.eq.s32.totalorder %s17, 1
      %p117 = por %p115, %p116
      %p118 = scmp.ne.s32.totalorder %s107, %s108
      %p119 = scmp.eq.s32.totalorder %s17, 0
      %p120 = por %p118, %p119
      %p121 = scmp.ne.s32.totalorder %s107, %s108
      %p122 = scmp.eq.s32.totalorder %s18, 1
      %p123 = por %p121, %p122
      %p125 = scmp.ne.s32.totalorder %s108, %s124
      %p126 = scmp.eq.s32.totalorder %s18, 0
      %p127 = por %p125, %p126
      %p128 = scmp.le.s32.totalorder 1, %s12
      %p129 = scmp.lt.s32.totalorder %s12, 3
      %p130 = pnand %p128, %p129
      %p131 = pneg %p130
      // Predicated region
      $region9: #{tpu_custom_call.1} parent=5 // pred_check
        _
      $region10: #{tpu_custom_call.1} parent=5 // pred_check_branch
        %133 = sbr.rel (%p130) target = $region12
      $region11: #{tpu_custom_call.1} parent=5 // pred_region
        %s134 = ssub.s32 %s12, 1
        // Predicated region
        $region13: #{tpu_custom_call.1} parent=11 // pred_check
          %p135 = pneg %p73
        $region14: #{tpu_custom_call.1} parent=11 // pred_check_branch
          %137 = sbr.rel (%p135) target = $region16
        $region15: #{tpu_custom_call.1} parent=11 // pred_region
          _
        $region16: #{tpu_custom_call.1} parent=11 // pred_fallthru
          _
        // Predicated region
        $region17: #{tpu_custom_call.1} parent=11 // pred_check
          %p138 = pneg %p94
        $region18: #{tpu_custom_call.1} parent=11 // pred_check_branch
          %140 = sbr.rel (%p138) target = $region20
        $region19: #{tpu_custom_call.1} parent=11 // pred_region
          _
        $region20: #{tpu_custom_call.1} parent=11 // pred_fallthru
          _
      $region12: #{tpu_custom_call.1} parent=5 // pred_fallthru
        _
      %p141 = scmp.lt.s32.totalorder %s12, 2
      // Predicated region
      $region21: #{tpu_custom_call.1} parent=5 // pred_check
        %p142 = pneg %p141
      $region22: #{tpu_custom_call.1} parent=5 // pred_check_branch
        %144 = sbr.rel (%p142) target = $region24
      $region23: #{tpu_custom_call.1} parent=5 // pred_region
        // Predicated region
        $region25: #{tpu_custom_call.1} parent=23 // pred_check
          %p145 = pneg %p46
        $region26: #{tpu_custom_call.1} parent=23 // pred_check_branch
          %147 = sbr.rel (%p145) target = $region28
        $region27: #{tpu_custom_call.1} parent=23 // pred_region
          %s148 = sand.u32 %s36, 1
          %s149 = scalar_lea.sflag [#allocation5], %s148
          %s150 = sand.u32 %s36, 1
          %s151 = smul.addr %s150, 8
          %s152 = scalar_lea.vmem [#allocation4], %s151
          %s153 = smul.u32 2, %s20
          %s155 = ssub.s32 128, 128
          %156 = vsyncadd %s149, %s155
          %s157 = smul.addr %s19, 2
          %s158 = sadd.s32 %s153, %s157
          %s159 = smul.addr %s158, 64
          %s160 = scalar_lea.hbm %s0, %s159
          %s162 = sshll.u32 %s152, 4
          %s163 = int_to_ptr.vmem [resolvable:$true] %s162
          %165 = dma.hbm_to_vmem [thread:$0]  %s160, 128, %s163, %s149
        $region28: #{tpu_custom_call.1} parent=23 // pred_fallthru
          _
      $region24: #{tpu_custom_call.1} parent=5 // pred_fallthru
        _
      %p166 = scmp.le.s32.totalorder 1, %s12
      %p167 = scmp.lt.s32.totalorder %s12, 3
      %p168 = pnand %p166, %p167
      %p169 = pneg %p168
      // Predicated region
      $region29: #{tpu_custom_call.1} parent=5 // pred_check
        _
      $region30: #{tpu_custom_call.1} parent=5 // pred_check_branch
        %171 = sbr.rel (%p168) target = $region32
      $region31: #{tpu_custom_call.1} parent=5 // pred_region
        %s172 = ssub.s32 %s12, 1
        %s173 = sand.u32 %s39, 1
        %s174 = scalar_lea.sflag [#allocation5], %s173
        %s175 = sand.u32 %s39, 1
        %s176 = smul.addr %s175, 8
        %s177 = scalar_lea.vmem [#allocation4], %s176
        // Predicated region
        $region33: #{tpu_custom_call.1} parent=31 // pred_check
          %p178 = pneg %p52
        $region34: #{tpu_custom_call.1} parent=31 // pred_check_branch
          %180 = sbr.rel (%p178) target = $region36
        $region35: #{tpu_custom_call.1} parent=31 // pred_region
          %181 = dma.done %s174, 128
        $region36: #{tpu_custom_call.1} parent=31 // pred_fallthru
          _
        %s182 = sand.u32 %s39, 1
        %s183 = scalar_lea.sflag [#allocation5], %s182
        %s184 = sand.u32 %s39, 1
        %s185 = smul.addr %s184, 8
        %s186 = scalar_lea.vmem [#allocation4], %s185
        %p187 = pneg %p52
        %p188 = pneg %p49
        %p189 = pneg %p73
        %p190 = pneg %p70
        %p191 = pneg %p94
        %p192 = pneg %p91
        %p193 = pneg %p120
        %p194 = pneg %p117
        %p195 = scmp.lt.s32.totalorder %s21, 1
        %s196 = scalar_select %p195, %s21, 1
        %s197 = smul.addr %s196, 4
        %s198 = scalar_lea.vmem %s3, %s197
        %s199 = smul.u32 2, %s22
        %p200 = scmp.lt.s32.totalorder %s21, 1
        %s201 = scalar_select %p200, %s21, 1
        %s202 = smul.addr %s201, 4
        %s203 = scalar_lea.vmem %s3, %s202
        %p204 = scmp.eq.s32.totalorder %s22, 0
        // Predicated region
        $region37: #{tpu_custom_call.1} parent=31 // pred_check
          %p205 = pneg %p204
        $region38: #{tpu_custom_call.1} parent=31 // pred_check_branch
          %207 = sbr.rel (%p205) target = $region40
        $region39: #{tpu_custom_call.1} parent=31 // pred_region
          %vm208 = vcmask 3072
          %209 = vst.msk [vmem:[#allocation2] sm:$0xf] %vm208, 0.0
          %210 = vst.msk [vmem:[#allocation3] sm:$0xf] %vm208, -inf
        $region40: #{tpu_custom_call.1} parent=31 // pred_fallthru
          _
        %v211 = vld [vmem:[%s177] sm:$0xff]
        %v212 = vld [vmem:[#allocation2] sm:$0xf]
        %v214 = vcombine.high %v211, %v211
        %vm216 = vcmask 1043456
        %v217 = vsel %vm216, %v211, 0.0
        %v218 = vsel %vm216, %v214, 0.0
        %v219 = vadd.f32 %v217, %v218
        %220 = vadd.xlane.f32.xlu0 %v219
        %v221 = vpop.xlane.xlu0 %220
        %v222 = vadd.f32 %v212, %v221
        %vm223 = vcmask 3072
        %224 = vst.msk [vmem:[#allocation2] sm:$0xf] %vm223, %v222
        %v225 = vld [vmem:[#allocation3] sm:$0xf]
        %v226 = vsel %vm216, %v211, -inf
        %v227 = vsel %vm216, %v214, -inf
        %v228 = vmax.f32 %v226, %v227
        %229 = vmax.xlane.f32.xlu0 %v228
        %v230 = vpop.xlane.xlu0 %229
        %v231 = vmax.f32 %v225, %v230
        %232 = vst.msk [vmem:[#allocation3] sm:$0xf] %vm223, %v231
        // Predicated region
        $region41: #{tpu_custom_call.1} parent=31 // pred_check
          %p233 = pneg %p204
        $region42: #{tpu_custom_call.1} parent=31 // pred_check_branch
          %235 = sbr.rel (%p233) target = $region44
        $region43: #{tpu_custom_call.1} parent=31 // pred_region
          %v236 = vld [vmem:[#allocation2] sm:$0xf]
          %v237 = vld [vmem:[#allocation3] sm:$0xf]
          %v238 = vld [vmem:[%s1] sm:$0x1]
          %v239 = vld [vmem:[%s2] sm:$0xf]
          %v240 = vmul.f32 %v236, 0.00390625
          %v241 = vlaneseq
          %v242 = vand.u32 %v241, 127
          %vm243 = vcmp.eq.s32.totalorder %v242, 0
          %245 = vset.pattern.permute.xlu0 0
          %246 = vperm.xlu0 %245, %v240
          %v247 = vpop.permute.xlu0 %246
          %250 = vset.pattern.permute.xlu0 0
          %251 = vperm.xlu0 %250, %v237
          %v252 = vpop.permute.xlu0 %251
          %v254 = vsel %vm243, %v247, %v252
          %vm255 = vcmask 31744
          %v257 = vsel %vm255, %v238, 0
          %v260 = vsel %vm216, %v254, 0
          %262 = vmatprep.subr.mxu0 0.0
          %263 = vmatpush1.msra.mxu0 %v260
          %264 = vmatprep.subr.mxu0 0.0
          %265 = vmatpush1.msra.mxu0 0.0
          %266 = vmatprep.subr.mxu0 0.0
          %267 = vmatpush1.msra.mxu0 0.0
          %268 = vmatprep.subr.mxu0 0.0
          %269 = vmatpush1.msra.mxu0 0.0
          %270 = vmatprep.subr.mxu0 0.0
          %271 = vmatpush1.msra.mxu0 0.0
          %272 = vmatprep.subr.mxu0 0.0
          %273 = vmatpush1.msra.mxu0 0.0
          %274 = vmatprep.subr.mxu0 0.0
          %275 = vmatpush1.msra.mxu0 0.0
          %276 = vmatprep.subr.mxu0 0.0
          %277 = vmatpush1.msra.mxu0 0.0
          %278 = vmatprep.subr.mxu0 0.0
          %279 = vmatpush1.msra.mxu0 0.0
          %280 = vmatprep.subr.mxu0 0.0
          %281 = vmatpush1.msra.mxu0 0.0
          %282 = vmatprep.subr.mxu0 0.0
          %283 = vmatpush1.msra.mxu0 0.0
          %284 = vmatprep.subr.mxu0 0.0
          %285 = vmatpush1.msra.mxu0 0.0
          %286 = vmatprep.subr.mxu0 0.0
          %287 = vmatpush1.msra.mxu0 0.0
          %288 = vmatprep.subr.mxu0 0.0
          %289 = vmatpush1.msra.mxu0 0.0
          %290 = vmatprep.subr.mxu0 0.0
          %291 = vmatpush1.msra.mxu0 0.0
          %292 = vmatprep.subr.mxu0 0.0
          %293 = vmatpush1.msra.mxu0 0.0
          %294 = vmatprep.subr.mxu0 0.0
          %295 = vmatpush1.msra.mxu0 0.0
          %296 = vmatprep.subr.mxu0 0.0
          %297 = vmatpush1.msra.mxu0 0.0
          %298 = vmatprep.subr.mxu0 0.0
          %299 = vmatpush1.msra.mxu0 0.0
          %300 = vmatprep.subr.mxu0 0.0
          %301 = vmatpush1.msra.mxu0 0.0
          %302 = vmatprep.subr.mxu0 0.0
          %303 = vmatpush1.msra.mxu0 0.0
          %304 = vmatprep.subr.mxu0 0.0
          %305 = vmatpush1.msra.mxu0 0.0
          %306 = vmatprep.subr.mxu0 0.0
          %307 = vmatpush1.msra.mxu0 0.0
          %308 = vmatprep.subr.mxu0 0.0
          %309 = vmatpush1.msra.mxu0 0.0
          %310 = vmatprep.subr.mxu0 0.0
          %311 = vmatpush1.msra.mxu0 0.0
          %312 = vmatprep.subr.mxu0 0.0
          %313 = vmatpush1.msra.mxu0 0.0
          %314 = vmatprep.subr.mxu0 0.0
          %315 = vmatpush1.msra.mxu0 0.0
          %316 = vmatprep.subr.mxu0 0.0
          %317 = vmatpush1.msra.mxu0 0.0
          %318 = vmatprep.subr.mxu0 0.0
          %319 = vmatpush1.msra.mxu0 0.0
          %320 = vmatprep.subr.mxu0 0.0
          %321 = vmatpush1.msra.mxu0 0.0
          %322 = vmatprep.subr.mxu0 0.0
          %323 = vmatpush1.msra.mxu0 0.0
          %324 = vmatprep.subr.mxu0 0.0
          %325 = vmatpush1.msra.mxu0 0.0
          %326 = vmatprep.mubr.f32.mxu0 0.0
          %327 = vmatmul.mubr.f32.gmra.mrb[0].mxu0 %v257
          %v328 = vpop.f32.mrb[0].mxu0
          %v329 = vadd.f32 0.0, %v328
          %v330 = vpop.f32.mrb[0].mxu0
          %331 = vdwg.mxu0
          %v332 = vmax.f32 %v329, 0.0
          %vm333 = vcmask 7168
          %v335 = vsel %vm333, %v239, 0
          %vm337 = vcmask 1040384
          %v339 = vsel %vm337, %v332, 0
          %341 = vmatprep.subr.mxu0 0.0
          %342 = vmatpush1.msra.mxu0 %v339
          %343 = vmatprep.subr.mxu0 0.0
          %344 = vmatpush1.msra.mxu0 0.0
          %345 = vmatprep.subr.mxu0 0.0
          %346 = vmatpush1.msra.mxu0 0.0
          %347 = vmatprep.subr.mxu0 0.0
          %348 = vmatpush1.msra.mxu0 0.0
          %349 = vmatprep.subr.mxu0 0.0
          %350 = vmatpush1.msra.mxu0 0.0
          %351 = vmatprep.subr.mxu0 0.0
          %352 = vmatpush1.msra.mxu0 0.0
          %353 = vmatprep.subr.mxu0 0.0
          %354 = vmatpush1.msra.mxu0 0.0
          %355 = vmatprep.subr.mxu0 0.0
          %356 = vmatpush1.msra.mxu0 0.0
          %357 = vmatprep.subr.mxu0 0.0
          %358 = vmatpush1.msra.mxu0 0.0
          %359 = vmatprep.subr.mxu0 0.0
          %360 = vmatpush1.msra.mxu0 0.0
          %361 = vmatprep.subr.mxu0 0.0
          %362 = vmatpush1.msra.mxu0 0.0
          %363 = vmatprep.subr.mxu0 0.0
          %364 = vmatpush1.msra.mxu0 0.0
          %365 = vmatprep.subr.mxu0 0.0
          %366 = vmatpush1.msra.mxu0 0.0
          %367 = vmatprep.subr.mxu0 0.0
          %368 = vmatpush1.msra.mxu0 0.0
          %369 = vmatprep.subr.mxu0 0.0
          %370 = vmatpush1.msra.mxu0 0.0
          %371 = vmatprep.subr.mxu0 0.0
          %372 = vmatpush1.msra.mxu0 0.0
          %373 = vmatprep.subr.mxu0 0.0
          %374 = vmatpush1.msra.mxu0 0.0
          %375 = vmatprep.subr.mxu0 0.0
          %376 = vmatpush1.msra.mxu0 0.0
          %377 = vmatprep.subr.mxu0 0.0
          %378 = vmatpush1.msra.mxu0 0.0
          %379 = vmatprep.subr.mxu0 0.0
          %380 = vmatpush1.msra.mxu0 0.0
          %381 = vmatprep.subr.mxu0 0.0
          %382 = vmatpush1.msra.mxu0 0.0
          %383 = vmatprep.subr.mxu0 0.0
          %384 = vmatpush1.msra.mxu0 0.0
          %385 = vmatprep.subr.mxu0 0.0
          %386 = vmatpush1.msra.mxu0 0.0
          %387 = vmatprep.subr.mxu0 0.0
          %388 = vmatpush1.msra.mxu0 0.0
          %389 = vmatprep.subr.mxu0 0.0
          %390 = vmatpush1.msra.mxu0 0.0
          %391 = vmatprep.subr.mxu0 0.0
          %392 = vmatpush1.msra.mxu0 0.0
          %393 = vmatprep.subr.mxu0 0.0
          %394 = vmatpush1.msra.mxu0 0.0
          %395 = vmatprep.subr.mxu0 0.0
          %396 = vmatpush1.msra.mxu0 0.0
          %397 = vmatprep.subr.mxu0 0.0
          %398 = vmatpush1.msra.mxu0 0.0
          %399 = vmatprep.subr.mxu0 0.0
          %400 = vmatpush1.msra.mxu0 0.0
          %401 = vmatprep.subr.mxu0 0.0
          %402 = vmatpush1.msra.mxu0 0.0
          %403 = vmatprep.subr.mxu0 0.0
          %404 = vmatpush1.msra.mxu0 0.0
          %405 = vmatprep.mubr.f32.mxu0 0.0
          %406 = vmatmul.mubr.f32.gmra.mrb[0].mxu0 %v335
          %v407 = vpop.f32.mrb[0].mxu0
          %v408 = vadd.f32 0.0, %v407
          %v409 = vpop.f32.mrb[0].mxu0
          %410 = vdwg.mxu0
          %vm411 = vcmask 11264
          %v412 = vsel %vm411, %v408, 0.0
          %413 = vadd.xlane.f32.xlu0 %v412
          %v414 = vpop.xlane.xlu0 %413
          %v415 = vxor.u32 %v414, 2147483648
          %v416 = vmul.f32 %v415, 1.442695
          %v417 = vpow.pop %v416
          %v418 = vadd.f32 %v417, 1.0
          %v419 = vrcp.pop %v418
          %v420 = vmul.f32 1.0, %v419
          %421 = vst.msk [vmem:[%s203] sm:$0xf] %vm223, %v420
        $region44: #{tpu_custom_call.1} parent=31 // pred_fallthru
          _
        %p422 = scmp.lt.s32.totalorder %s21, 1
        %s423 = scalar_select %p422, %s21, 1
        %s424 = smul.addr %s423, 4
        %s425 = scalar_lea.vmem %s3, %s424
        // Predicated region
        $region45: #{tpu_custom_call.1} parent=31 // pred_check
          %p426 = pneg %p117
        $region46: #{tpu_custom_call.1} parent=31 // pred_check_branch
          %428 = sbr.rel (%p426) target = $region48
        $region47: #{tpu_custom_call.1} parent=31 // pred_region
          _
        $region48: #{tpu_custom_call.1} parent=31 // pred_fallthru
          _
      $region32: #{tpu_custom_call.1} parent=5 // pred_fallthru
        _
      %p429 = scmp.le.s32.totalorder 2, %s12
      // Predicated region
      $region49: #{tpu_custom_call.1} parent=5 // pred_check
        %p430 = pneg %p429
      $region50: #{tpu_custom_call.1} parent=5 // pred_check_branch
        %432 = sbr.rel (%p430) target = $region52
      $region51: #{tpu_custom_call.1} parent=5 // pred_region
        %s433 = ssub.s32 %s12, 2
        // Predicated region
        $region53: #{tpu_custom_call.1} parent=51 // pred_check
          %p434 = pneg %p123
        $region54: #{tpu_custom_call.1} parent=51 // pred_check_branch
          %436 = sbr.rel (%p434) target = $region56
        $region55: #{tpu_custom_call.1} parent=51 // pred_region
          %p437 = scmp.lt.s32.totalorder %s23, 1
          %s438 = scalar_select %p437, %s23, 1
          %s439 = smul.addr %s438, 4
          %s440 = scalar_lea.vmem %s3, %s439
        $region56: #{tpu_custom_call.1} parent=51 // pred_fallthru
          _
      $region52: #{tpu_custom_call.1} parent=5 // pred_fallthru
        _
    $region6: #{tpu_custom_call.1} parent=1 // loop_footer
      %s16 = sadd.s32 1, %s12
    $region7: #{tpu_custom_call.1} parent=1 // loop_footer_branch
      %11 = sbr.rel target = $region3
    $region8: #{tpu_custom_call.1} parent=1 // loop_exit
      _
    %441 = vsyncpa [#allocation5], 1
    %s442 = scalar_lea.sflag [#allocation5], 1
    %443 = vsyncpa %s442, 1

</llo_original>
